<compile_context>
chip_gen: v7x
topology: tpu7x:2x2x1
jax: 0.10.0
libtpu: 0.0.40
codegen_flags: <defaults>
</compile_context>

<pallas_src>
import math
import functools

import jax
import jax.numpy as jnp
from jax.experimental import pallas as pl
from jax.experimental.pallas import tpu as pltpu


# ------------------------------- activations --------------------------------

def _gelu_tanh(x):
    # tanh-approximate GELU (HF "gelu_new" / torch GELU(approximate='tanh')).
    c = math.sqrt(2.0 / math.pi)
    return 0.5 * x * (1.0 + jnp.tanh(c * (x + 0.044715 * (x * x * x))))


def _relu(x):
    return jnp.maximum(x, 0.0)


def _silu(x):
    return x * (1.0 / (1.0 + jnp.exp(-x)))


# TODO(synk): exact erf-based GELU (HF ACT2FN["gelu"]) — erf has no guaranteed
# Mosaic lowering, so "gelu" maps to the tanh approximation here.
_ACT2FN = {
    "gelu": _gelu_tanh,
    "gelu_new": _gelu_tanh,
    "gelu_pytorch_tanh": _gelu_tanh,
    "relu": _relu,
    "silu": _silu,
    "swish": _silu,
}


# --------------------------------- kernel ------------------------------------

def _split_intermediate_kernel(x_ref, w1_ref, b1_ref, w2_ref, b2_ref, o_ref,
                               *, d1, act_fn):
    x = x_ref[...]                                                  # (tm, Din)

    # dense1 -> activation, written into the left lane-slice of the output.
    h1 = jnp.dot(x, w1_ref[...], preferred_element_type=jnp.float32)
    h1 = h1 + b1_ref[...].astype(jnp.float32)
    o_ref[:, :d1] = act_fn(h1).astype(o_ref.dtype)

    # dense2 -> activation, written into the right lane-slice of the output.
    h2 = jnp.dot(x, w2_ref[...], preferred_element_type=jnp.float32)
    h2 = h2 + b2_ref[...].astype(jnp.float32)
    o_ref[:, d1:] = act_fn(h2).astype(o_ref.dtype)


# --------------------------------- wrapper -----------------------------------

def _pick_block_rows(din, dout, itemsize, vmem_budget=24 * 1024 * 1024):
    """Largest row tile (multiple of 8, <=512) whose double-buffered x/out
    tiles plus the resident weights fit inside a conservative VMEM budget."""
    weight_bytes = (din * dout + dout) * itemsize
    per_row = (din + dout) * itemsize * 2          # x + out, double-buffered
    avail = max(vmem_budget - 2 * weight_bytes, per_row * 8)
    tm = max(8, min(512, avail // per_row))
    return int((tm // 8) * 8)


def split_sub_roberta_intermediate(hidden_states, w1, b1, w2, b2,
                                   *, hidden_act="gelu", block_rows=None):
    """Fused concat([act(x@W1+b1), act(x@W2+b2)], -1).

    hidden_states: (..., Din);  w1: (Din, d1), b1: (d1,);  w2: (Din, d2), b2: (d2,)
    (weights are stored (in, out), i.e. already transposed vs. nn.Linear.weight).
    """
    act_fn = _ACT2FN[hidden_act] if isinstance(hidden_act, str) else hidden_act

    orig_shape = hidden_states.shape
    din = orig_shape[-1]
    d1 = w1.shape[1]
    d2 = w2.shape[1]
    dout = d1 + d2
    rows = math.prod(orig_shape[:-1])
    itemsize = jnp.dtype(hidden_states.dtype).itemsize

    x2 = hidden_states.reshape(rows, din)
    b1_2 = b1.reshape(1, d1)
    b2_2 = b2.reshape(1, d2)

    if block_rows is None:
        block_rows = _pick_block_rows(din, dout, itemsize)

    # One block when small; otherwise row-tiled parallel grid.
    tm = rows if rows <= block_rows else block_rows
    rows_p = pl.cdiv(rows, tm) * tm
    if rows_p != rows:
        x2 = jnp.pad(x2, ((0, rows_p - rows), (0, 0)))
    grid = (rows_p // tm,)

    kernel = functools.partial(_split_intermediate_kernel, d1=d1, act_fn=act_fn)

    cost = pl.CostEstimate(
        flops=2 * rows_p * din * dout + 2 * rows_p * dout,
        transcendentals=rows_p * dout,
        bytes_accessed=(rows_p * din + din * dout + dout + rows_p * dout) * itemsize,
    )

    out = pl.pallas_call(
        kernel,
        out_shape=jax.ShapeDtypeStruct((rows_p, dout), hidden_states.dtype),
        grid_spec=pltpu.PrefetchScalarGridSpec(
            num_scalar_prefetch=0,
            grid=grid,
            in_specs=[
                pl.BlockSpec((tm, din), lambda i: (i, 0)),    # hidden rows
                pl.BlockSpec((din, d1), lambda i: (0, 0)),    # dense1 weight
                pl.BlockSpec((1, d1), lambda i: (0, 0)),      # dense1 bias
                pl.BlockSpec((din, d2), lambda i: (0, 0)),    # dense2 weight
                pl.BlockSpec((1, d2), lambda i: (0, 0)),      # dense2 bias
            ],
            out_specs=pl.BlockSpec((tm, dout), lambda i: (i, 0)),
        ),
        compiler_params=pltpu.CompilerParams(
            dimension_semantics=("parallel",)),
        cost_estimate=cost,
    )(x2, w1, b1_2, w2, b2_2)

    if rows_p != rows:
        out = out[:rows]
    return out.reshape(*orig_shape[:-1], dout)


# --------------------------------- reference ---------------------------------

def _reference(hidden_states, w1, b1, w2, b2, act_fn):
    h1 = act_fn(hidden_states @ w1 + b1)
    h2 = act_fn(hidden_states @ w2 + b2)
    return jnp.concatenate([h1, h2], axis=-1)


if __name__ == "__main__":
    # small config: input_dim=32, output_dim1=128, output_dim2=256 (lane-aligned),
    # hidden_act = "gelu" (tanh approximation), batch=2, seq=8.
    B, S, Din = 2, 8, 32
    d1, d2 = 128, 256

    key = jax.random.PRNGKey(0)
    k = jax.random.split(key, 5)
    scale = 0.05
    hidden_states = jax.random.normal(k[0], (B, S, Din), jnp.float32)
    w1 = scale * jax.random.normal(k[1], (Din, d1), jnp.float32)
    b1 = scale * jax.random.normal(k[2], (d1,), jnp.float32)
    w2 = scale * jax.random.normal(k[3], (Din, d2), jnp.float32)
    b2 = scale * jax.random.normal(k[4], (d2,), jnp.float32)

    out = split_sub_roberta_intermediate(hidden_states, w1, b1, w2, b2,
                                         hidden_act="gelu")
    out = jax.block_until_ready(out)

    ref = _reference(hidden_states, w1, b1, w2, b2, _ACT2FN["gelu"])
    assert out.shape == (B, S, d1 + d2)
    err = jnp.max(jnp.abs(out - ref))
    assert jnp.allclose(out, ref, atol=1e-4, rtol=1e-4), f"max abs err {err}"
    print("KERNEL_OK")
</pallas_src>

<mosaic_0001>
module attributes {stable_mosaic.version = 11 : i64} {
  func.func @_split_intermediate_kernel(%arg0: i32, %arg1: memref<16x32xf32, #tpu.memory_space<vmem>>, %arg2: memref<32x128xf32, #tpu.memory_space<vmem>>, %arg3: memref<1x128xf32, #tpu.memory_space<vmem>>, %arg4: memref<32x256xf32, #tpu.memory_space<vmem>>, %arg5: memref<1x256xf32, #tpu.memory_space<vmem>>, %arg6: memref<16x384xf32, #tpu.memory_space<vmem>>) attributes {dimension_semantics = [#tpu.dimension_semantics<parallel>], iteration_bounds = array<i64: 1>, scalar_prefetch = 0 : i64, scratch_operands = 0 : i64, tpu.core_type = #tpu.core_type<tc>, window_params = [{transform_indices = @transform_0, window_bounds = array<i64: 16, 32>}, {pipeline_mode = #tpu.pipeline_mode<synchronous>, transform_indices = @transform_1, window_bounds = array<i64: 32, 128>}, {pipeline_mode = #tpu.pipeline_mode<synchronous>, transform_indices = @transform_2, window_bounds = array<i64: 1, 128>}, {pipeline_mode = #tpu.pipeline_mode<synchronous>, transform_indices = @transform_3, window_bounds = array<i64: 32, 256>}, {pipeline_mode = #tpu.pipeline_mode<synchronous>, transform_indices = @transform_4, window_bounds = array<i64: 1, 256>}, {transform_indices = @transform_5, window_bounds = array<i64: 16, 384>}]} {
    %c0 = arith.constant 0 : index
    %c0_0 = arith.constant 0 : index
    %0 = vector.load %arg1[%c0, %c0_0] : memref<16x32xf32, #tpu.memory_space<vmem>>, vector<16x32xf32>
    %c0_1 = arith.constant 0 : index
    %c0_2 = arith.constant 0 : index
    %1 = vector.load %arg2[%c0_1, %c0_2] : memref<32x128xf32, #tpu.memory_space<vmem>>, vector<32x128xf32>
    %cst = arith.constant dense<0.000000e+00> : vector<16x128xf32>
    %2 = tpu.matmul %0, %1, %cst {dimension_numbers = #tpu.dot_dimension_numbers<[1], [0], [0], [1], [0, 0, 1, 1], [], []>} : vector<16x32xf32>, vector<32x128xf32>, vector<16x128xf32> -> vector<16x128xf32>
    %c0_3 = arith.constant 0 : index
    %c0_4 = arith.constant 0 : index
    %3 = vector.load %arg3[%c0_3, %c0_4] : memref<1x128xf32, #tpu.memory_space<vmem>>, vector<1x128xf32>
    %4 = vector.broadcast %3 : vector<1x128xf32> to vector<16x128xf32>
    %5 = arith.addf %2, %4 : vector<16x128xf32>
    %cst_5 = arith.constant 5.000000e-01 : f32
    %6 = vector.broadcast %cst_5 : f32 to vector<16x128xf32>
    %7 = arith.mulf %6, %5 : vector<16x128xf32>
    %8 = arith.mulf %5, %5 : vector<16x128xf32>
    %9 = arith.mulf %8, %5 : vector<16x128xf32>
    %cst_6 = arith.constant 4.471500e-02 : f32
    %10 = vector.broadcast %cst_6 : f32 to vector<16x128xf32>
    %11 = arith.mulf %10, %9 : vector<16x128xf32>
    %12 = arith.addf %5, %11 : vector<16x128xf32>
    %cst_7 = arith.constant 0.797884583 : f32
    %13 = vector.broadcast %cst_7 : f32 to vector<16x128xf32>
    %14 = arith.mulf %13, %12 : vector<16x128xf32>
    %15 = math.tanh %14 : vector<16x128xf32>
    %cst_8 = arith.constant 1.000000e+00 : f32
    %16 = vector.broadcast %cst_8 : f32 to vector<16x128xf32>
    %17 = arith.addf %16, %15 : vector<16x128xf32>
    %18 = arith.mulf %7, %17 : vector<16x128xf32>
    %c0_9 = arith.constant 0 : index
    %c0_10 = arith.constant 0 : index
    %19 = vector.load %arg6[%c0_9, %c0_10] : memref<16x384xf32, #tpu.memory_space<vmem>>, vector<16x128xf32>
    tpu.vector_store %arg6[%c0_9, %c0_10], %18 {strides = array<i32>} : memref<16x384xf32, #tpu.memory_space<vmem>>, vector<16x128xf32>,
    %c0_11 = arith.constant 0 : index
    %c0_12 = arith.constant 0 : index
    %20 = vector.load %arg4[%c0_11, %c0_12] : memref<32x256xf32, #tpu.memory_space<vmem>>, vector<32x256xf32>
    %cst_13 = arith.constant dense<0.000000e+00> : vector<16x256xf32>
    %21 = tpu.matmul %0, %20, %cst_13 {dimension_numbers = #tpu.dot_dimension_numbers<[1], [0], [0], [1], [0, 0, 1, 1], [], []>} : vector<16x32xf32>, vector<32x256xf32>, vector<16x256xf32> -> vector<16x256xf32>
    %c0_14 = arith.constant 0 : index
    %c0_15 = arith.constant 0 : index
    %22 = vector.load %arg5[%c0_14, %c0_15] : memref<1x256xf32, #tpu.memory_space<vmem>>, vector<1x256xf32>
    %23 = vector.broadcast %22 : vector<1x256xf32> to vector<16x256xf32>
    %24 = arith.addf %21, %23 : vector<16x256xf32>
    %cst_16 = arith.constant 5.000000e-01 : f32
    %25 = vector.broadcast %cst_16 : f32 to vector<16x256xf32>
    %26 = arith.mulf %25, %24 : vector<16x256xf32>
    %27 = arith.mulf %24, %24 : vector<16x256xf32>
    %28 = arith.mulf %27, %24 : vector<16x256xf32>
    %cst_17 = arith.constant 4.471500e-02 : f32
    %29 = vector.broadcast %cst_17 : f32 to vector<16x256xf32>
    %30 = arith.mulf %29, %28 : vector<16x256xf32>
    %31 = arith.addf %24, %30 : vector<16x256xf32>
    %cst_18 = arith.constant 0.797884583 : f32
    %32 = vector.broadcast %cst_18 : f32 to vector<16x256xf32>
    %33 = arith.mulf %32, %31 : vector<16x256xf32>
    %34 = math.tanh %33 : vector<16x256xf32>
    %cst_19 = arith.constant 1.000000e+00 : f32
    %35 = vector.broadcast %cst_19 : f32 to vector<16x256xf32>
    %36 = arith.addf %35, %34 : vector<16x256xf32>
    %37 = arith.mulf %26, %36 : vector<16x256xf32>
    %c0_20 = arith.constant 0 : index
    %c128 = arith.constant 128 : index
    %38 = vector.load %arg6[%c0_20, %c128] : memref<16x384xf32, #tpu.memory_space<vmem>>, vector<16x256xf32>
    tpu.vector_store %arg6[%c0_20, %c128], %37 {strides = array<i32>} : memref<16x384xf32, #tpu.memory_space<vmem>>, vector<16x256xf32>,
    return
  }
  func.func @transform_0(%arg0: i32) -> (i32, i32) {
    %c0_i32 = arith.constant 0 : i32
    %c0_i32_0 = arith.constant 0 : i32
    return %arg0, %c0_i32 : i32, i32
  }
  func.func @transform_1(%arg0: i32) -> (i32, i32) {
    %c0_i32 = arith.constant 0 : i32
    %c0_i32_0 = arith.constant 0 : i32
    %c0_i32_1 = arith.constant 0 : i32
    return %c0_i32, %c0_i32_0 : i32, i32
  }
  func.func @transform_2(%arg0: i32) -> (i32, i32) {
    %c0_i32 = arith.constant 0 : i32
    %c0_i32_0 = arith.constant 0 : i32
    %c0_i32_1 = arith.constant 0 : i32
    return %c0_i32, %c0_i32_0 : i32, i32
  }
  func.func @transform_3(%arg0: i32) -> (i32, i32) {
    %c0_i32 = arith.constant 0 : i32
    %c0_i32_0 = arith.constant 0 : i32
    %c0_i32_1 = arith.constant 0 : i32
    return %c0_i32, %c0_i32_0 : i32, i32
  }
  func.func @transform_4(%arg0: i32) -> (i32, i32) {
    %c0_i32 = arith.constant 0 : i32
    %c0_i32_0 = arith.constant 0 : i32
    %c0_i32_1 = arith.constant 0 : i32
    return %c0_i32, %c0_i32_0 : i32, i32
  }
  func.func @transform_5(%arg0: i32) -> (i32, i32) {
    %c0_i32 = arith.constant 0 : i32
    %c0_i32_0 = arith.constant 0 : i32
    return %arg0, %c0_i32 : i32, i32
  }
}

</mosaic_0001>

<llo_original>
// kernel: tpu_custom_call.1
$region0: #{tpu_custom_call.1}
  #allocation0 [shape = 'u32[]', space=smem, size = 0x4, offset = 0x4, fixed_abs, tag = 'smem constant byte address 0x4 - core index']
  #allocation1 [shape = 'u32[144,128]{1,0:T(1,128)}', space=vmem, size = 0x12000, scoped, tag = 'internal scratch']
  %s0 = inlined_call_operand.hbm [shape: f32[16,32], index: 0, kind: input, shape index: {}]
  %s1 = inlined_call_operand.hbm [shape: f32[32,128], index: 1, kind: input, shape index: {}]
  %s2 = inlined_call_operand.vmem [shape: f32[1,128], index: 2, kind: input, shape index: {}]
  %s3 = inlined_call_operand.hbm [shape: f32[32,256], index: 3, kind: input, shape index: {}]
  %s4 = inlined_call_operand.vmem [shape: f32[1,256], index: 4, kind: input, shape index: {}]
  %s5 = inlined_call_operand.hbm [shape: f32[16,384], index: 5, kind: output, shape index: {}]
  %s6 = sld [smem:[#allocation0]]
  $region42: #{tpu_custom_call.1} parent=0
    _
  %s8 = ssub.s32 1, %s6
  %s9 = scalar_select 0, %s8, %s6
  $region1: #{tpu_custom_call.1} parent=0
    #allocation2 [shape = 'u8[8192]{0}', space=vmem, size = 0x2000, scoped, tag = 'input window, operand 0, single buffered']
    #allocation3 [shape = 's32[1]{0}', space=sflag, size = 0x4, scoped, tag = 'scoped memory for tpu_custom_call.1']
    #allocation4 [shape = 's32[1]{0}', space=sflag, size = 0x4, scoped, tag = 'scoped memory for tpu_custom_call.1']
    #allocation5 [shape = 'u8[16384]{0}', space=vmem, size = 0x4000, scoped, tag = 'input window, operand 1, single buffered']
    #allocation6 [shape = 's32[1]{0}', space=sflag, size = 0x4, scoped, tag = 'scoped memory for tpu_custom_call.1']
    #allocation7 [shape = 'u8[32768]{0}', space=vmem, size = 0x8000, scoped, tag = 'input window, operand 3, single buffered']
    #allocation8 [shape = 'u8[24576]{0}', space=vmem, size = 0x6000, scoped, tag = 'output window, operand 0, single buffered']
    %10 = vsyncpa [#allocation3], 0
    %11 = vsyncpa [#allocation6], 0
    %12 = vsyncpa [#allocation4], 0
    // Predicated region
    $region2: #{tpu_custom_call.1} parent=1 // pred_check
      _
    $region3: #{tpu_custom_call.1} parent=1 // pred_check_branch
      %14 = sbr.rel (0) target = $region5
    $region4: #{tpu_custom_call.1} parent=1 // pred_region
      %s16 = ssub.s32 256, 256
      %17 = vsyncadd [#allocation3], %s16
      %s18 = sshll.u32 [#allocation2], 4
      %s19 = int_to_ptr.vmem [resolvable:$true] %s18
      %24 = dma.hbm_to_vmem [thread:$0]  %s0, 256, %s19, [#allocation3], 128, 128, 8
    $region5: #{tpu_custom_call.1} parent=1 // pred_fallthru
      _
    // Predicated region
    $region6: #{tpu_custom_call.1} parent=1 // pred_check
      _
    $region7: #{tpu_custom_call.1} parent=1 // pred_check_branch
      %26 = sbr.rel (0) target = $region9
    $region8: #{tpu_custom_call.1} parent=1 // pred_region
      %s28 = ssub.s32 512, 512
      %29 = vsyncadd [#allocation6], %s28
      %s30 = sshll.u32 [#allocation5], 4
      %s31 = int_to_ptr.vmem [resolvable:$true] %s30
      %36 = dma.hbm_to_vmem [thread:$0]  %s1, 512, %s31, [#allocation6], 128, 128, 8
    $region9: #{tpu_custom_call.1} parent=1 // pred_fallthru
      _
    // Predicated region
    $region10: #{tpu_custom_call.1} parent=1 // pred_check
      _
    $region11: #{tpu_custom_call.1} parent=1 // pred_check_branch
      %38 = sbr.rel (0) target = $region13
    $region12: #{tpu_custom_call.1} parent=1 // pred_region
      _
    $region13: #{tpu_custom_call.1} parent=1 // pred_fallthru
      _
    // Predicated region
    $region14: #{tpu_custom_call.1} parent=1 // pred_check
      _
    $region15: #{tpu_custom_call.1} parent=1 // pred_check_branch
      %40 = sbr.rel (0) target = $region17
    $region16: #{tpu_custom_call.1} parent=1 // pred_region
      %s42 = ssub.s32 1024, 1024
      %43 = vsyncadd [#allocation6], %s42
      %s44 = sshll.u32 [#allocation7], 4
      %s45 = int_to_ptr.vmem [resolvable:$true] %s44
      %50 = dma.hbm_to_vmem [thread:$0]  %s3, 1024, %s45, [#allocation6], 256, 256, 16
    $region17: #{tpu_custom_call.1} parent=1 // pred_fallthru
      _
    // Predicated region
    $region18: #{tpu_custom_call.1} parent=1 // pred_check
      _
    $region19: #{tpu_custom_call.1} parent=1 // pred_check_branch
      %52 = sbr.rel (0) target = $region21
    $region20: #{tpu_custom_call.1} parent=1 // pred_region
      _
    $region21: #{tpu_custom_call.1} parent=1 // pred_fallthru
      _
    // Predicated region
    $region22: #{tpu_custom_call.1} parent=1 // pred_check
      _
    $region23: #{tpu_custom_call.1} parent=1 // pred_check_branch
      %54 = sbr.rel (0) target = $region25
    $region24: #{tpu_custom_call.1} parent=1 // pred_region
      %55 = dma.done [#allocation3], 256
    $region25: #{tpu_custom_call.1} parent=1 // pred_fallthru
      _
    // Predicated region
    $region26: #{tpu_custom_call.1} parent=1 // pred_check
      _
    $region27: #{tpu_custom_call.1} parent=1 // pred_check_branch
      %57 = sbr.rel (0) target = $region29
    $region28: #{tpu_custom_call.1} parent=1 // pred_region
      %58 = dma.done [#allocation6], 512
    $region29: #{tpu_custom_call.1} parent=1 // pred_fallthru
      _
    // Predicated region
    $region30: #{tpu_custom_call.1} parent=1 // pred_check
      _
    $region31: #{tpu_custom_call.1} parent=1 // pred_check_branch
      %60 = sbr.rel (0) target = $region33
    $region32: #{tpu_custom_call.1} parent=1 // pred_region
      %61 = dma.done [#allocation6], 1024
    $region33: #{tpu_custom_call.1} parent=1 // pred_fallthru
      _
    %v62 = vld [vmem:[#allocation2] sm:$0xff]
    %v63 = vld [vmem:[#allocation2 + $0x8] sm:$0xff]
    %v64 = vld [vmem:[#allocation5] sm:$0xff]
    %v65 = vld [vmem:[#allocation5 + $0x8] sm:$0xff]
    %v66 = vld [vmem:[#allocation5 + $0x10] sm:$0xff]
    %v67 = vld [vmem:[#allocation5 + $0x18] sm:$0xff]
    %v68 = vld [vmem:[%s2] sm:$0x1]
    %v70 = vlaneseq
    %v71 = vshrl.u32 %v70, 7
    %v72 = vsub.s32 0, %v71
    %v73 = vrot.slane %v68, %v72
    %vm75 = vcmask 261120
    %v77 = vsel %vm75, %v62, 0
    %v80 = vsel %vm75, %v63, 0
    %82 = vmatprep.subr.mxu0 0.0
    %83 = vmatpush1.msra.mxu0 %v64
    %84 = vmatprep.subr.mxu0 0.0
    %85 = vmatpush1.msra.mxu0 %v65
    %86 = vmatprep.subr.mxu0 0.0
    %87 = vmatpush1.msra.mxu0 %v66
    %88 = vmatprep.subr.mxu0 0.0
    %89 = vmatpush1.msra.mxu0 %v67
    %90 = vmatprep.subr.mxu0 0.0
    %91 = vmatpush1.msra.mxu0 0.0
    %92 = vmatprep.subr.mxu0 0.0
    %93 = vmatpush1.msra.mxu0 0.0
    %94 = vmatprep.subr.mxu0 0.0
    %95 = vmatpush1.msra.mxu0 0.0
    %96 = vmatprep.subr.mxu0 0.0
    %97 = vmatpush1.msra.mxu0 0.0
    %98 = vmatprep.subr.mxu0 0.0
    %99 = vmatpush1.msra.mxu0 0.0
    %100 = vmatprep.subr.mxu0 0.0
    %101 = vmatpush1.msra.mxu0 0.0
    %102 = vmatprep.subr.mxu0 0.0
    %103 = vmatpush1.msra.mxu0 0.0
    %104 = vmatprep.subr.mxu0 0.0
    %105 = vmatpush1.msra.mxu0 0.0
    %106 = vmatprep.subr.mxu0 0.0
    %107 = vmatpush1.msra.mxu0 0.0
    %108 = vmatprep.subr.mxu0 0.0
    %109 = vmatpush1.msra.mxu0 0.0
    %110 = vmatprep.subr.mxu0 0.0
    %111 = vmatpush1.msra.mxu0 0.0
    %112 = vmatprep.subr.mxu0 0.0
    %113 = vmatpush1.msra.mxu0 0.0
    %114 = vmatprep.subr.mxu0 0.0
    %115 = vmatpush1.msra.mxu0 0.0
    %116 = vmatprep.subr.mxu0 0.0
    %117 = vmatpush1.msra.mxu0 0.0
    %118 = vmatprep.subr.mxu0 0.0
    %119 = vmatpush1.msra.mxu0 0.0
    %120 = vmatprep.subr.mxu0 0.0
    %121 = vmatpush1.msra.mxu0 0.0
    %122 = vmatprep.subr.mxu0 0.0
    %123 = vmatpush1.msra.mxu0 0.0
    %124 = vmatprep.subr.mxu0 0.0
    %125 = vmatpush1.msra.mxu0 0.0
    %126 = vmatprep.subr.mxu0 0.0
    %127 = vmatpush1.msra.mxu0 0.0
    %128 = vmatprep.subr.mxu0 0.0
    %129 = vmatpush1.msra.mxu0 0.0
    %130 = vmatprep.subr.mxu0 0.0
    %131 = vmatpush1.msra.mxu0 0.0
    %132 = vmatprep.subr.mxu0 0.0
    %133 = vmatpush1.msra.mxu0 0.0
    %134 = vmatprep.subr.mxu0 0.0
    %135 = vmatpush1.msra.mxu0 0.0
    %136 = vmatprep.subr.mxu0 0.0
    %137 = vmatpush1.msra.mxu0 0.0
    %138 = vmatprep.subr.mxu0 0.0
    %139 = vmatpush1.msra.mxu0 0.0
    %140 = vmatprep.subr.mxu0 0.0
    %141 = vmatpush1.msra.mxu0 0.0
    %142 = vmatprep.subr.mxu0 0.0
    %143 = vmatpush1.msra.mxu0 0.0
    %144 = vmatprep.subr.mxu0 0.0
    %145 = vmatpush1.msra.mxu0 0.0
    %146 = vmatprep.mubr.f32.mxu0 0.0
    %147 = vmatmul.mubr.f32.gmra.mrb[0].mxu0 %v77
    %v148 = vpop.f32.mrb[0].mxu0
    %v149 = vadd.f32 %v73, %v148
    %v150 = vpop.f32.mrb[0].mxu0
    %151 = vmatprep.mubr.f32.mxu0 0.0
    %152 = vmatmul.mubr.f32.gmra.mrb[0].mxu0 %v80
    %v153 = vpop.f32.mrb[0].mxu0
    %v154 = vadd.f32 %v73, %v153
    %v155 = vpop.f32.mrb[0].mxu0
    %156 = vdwg.mxu0
    %v157 = vmul.f32 %v149, 0.5
    %v158 = vmul.f32 %v154, 0.5
    %v159 = vmul.f32 %v149, %v149
    %v160 = vmul.f32 %v154, %v154
    %v161 = vmul.f32 %v159, %v149
    %v162 = vmul.f32 %v160, %v154
    %v163 = vmul.f32 %v161, 0.044715
    %v164 = vmul.f32 %v162, 0.044715
    %v165 = vadd.f32 %v149, %v163
    %v166 = vadd.f32 %v154, %v164
    %v167 = vmul.f32 %v165, 0.7978846
    %v168 = vmul.f32 %v166, 0.7978846
    %v169 = vtanh.pop %v167
    %v170 = vtanh.pop %v168
    %v171 = vadd.f32 %v169, 1.0
    %v172 = vadd.f32 %v170, 1.0
    %v173 = vmul.f32 %v157, %v171
    %v174 = vmul.f32 %v158, %v172
    %175 = vst [vmem:[#allocation8] sm:$0xff] %v173
    %176 = vst [vmem:[#allocation8 + $0x18] sm:$0xff] %v174
    %v177 = vld [vmem:[#allocation7] sm:$0xff]
    %v178 = vld [vmem:[#allocation7 + $0x8] sm:$0xff]
    %v179 = vld [vmem:[#allocation7 + $0x10] sm:$0xff]
    %v180 = vld [vmem:[#allocation7 + $0x18] sm:$0xff]
    %v181 = vld [vmem:[#allocation7 + $0x20] sm:$0xff]
    %v182 = vld [vmem:[#allocation7 + $0x28] sm:$0xff]
    %v183 = vld [vmem:[#allocation7 + $0x30] sm:$0xff]
    %v184 = vld [vmem:[#allocation7 + $0x38] sm:$0xff]
    %v185 = vld [vmem:[%s4] sm:$0x3]
    %v187 = vlaneseq
    %v188 = vshrl.u32 %v187, 7
    %v189 = vsub.s32 0, %v188
    %v190 = vrot.slane %v185, %v189
    %v191 = vlaneseq
    %v192 = vshrl.u32 %v191, 7
    %v193 = vsub.s32 1, %v192
    %v194 = vrot.slane %v185, %v193
    %197 = vmatprep.subr.mxu0 %v178
    %198 = vmatpush1.msra.mxu0 %v177
    %199 = vmatprep.subr.mxu0 %v180
    %200 = vmatpush1.msra.mxu0 %v179
    %201 = vmatprep.subr.mxu0 %v182
    %202 = vmatpush1.msra.mxu0 %v181
    %203 = vmatprep.subr.mxu0 %v184
    %204 = vmatpush1.msra.mxu0 %v183
    %205 = vmatprep.subr.mxu0 0.0
    %206 = vmatpush1.msra.mxu0 0.0
    %207 = vmatprep.subr.mxu0 0.0
    %208 = vmatpush1.msra.mxu0 0.0
    %209 = vmatprep.subr.mxu0 0.0
    %210 = vmatpush1.msra.mxu0 0.0
    %211 = vmatprep.subr.mxu0 0.0
    %212 = vmatpush1.msra.mxu0 0.0
    %213 = vmatprep.subr.mxu0 0.0
    %214 = vmatpush1.msra.mxu0 0.0
    %215 = vmatprep.subr.mxu0 0.0
    %216 = vmatpush1.msra.mxu0 0.0
    %217 = vmatprep.subr.mxu0 0.0
    %218 = vmatpush1.msra.mxu0 0.0
    %219 = vmatprep.subr.mxu0 0.0
    %220 = vmatpush1.msra.mxu0 0.0
    %221 = vmatprep.subr.mxu0 0.0
    %222 = vmatpush1.msra.mxu0 0.0
    %223 = vmatprep.subr.mxu0 0.0
    %224 = vmatpush1.msra.mxu0 0.0
    %225 = vmatprep.subr.mxu0 0.0
    %226 = vmatpush1.msra.mxu0 0.0
    %227 = vmatprep.subr.mxu0 0.0
    %228 = vmatpush1.msra.mxu0 0.0
    %229 = vmatprep.subr.mxu0 0.0
    %230 = vmatpush1.msra.mxu0 0.0
    %231 = vmatprep.subr.mxu0 0.0
    %232 = vmatpush1.msra.mxu0 0.0
    %233 = vmatprep.subr.mxu0 0.0
    %234 = vmatpush1.msra.mxu0 0.0
    %235 = vmatprep.subr.mxu0 0.0
    %236 = vmatpush1.msra.mxu0 0.0
    %237 = vmatprep.subr.mxu0 0.0
    %238 = vmatpush1.msra.mxu0 0.0
    %239 = vmatprep.subr.mxu0 0.0
    %240 = vmatpush1.msra.mxu0 0.0
    %241 = vmatprep.subr.mxu0 0.0
    %242 = vmatpush1.msra.mxu0 0.0
    %243 = vmatprep.subr.mxu0 0.0
    %244 = vmatpush1.msra.mxu0 0.0
    %245 = vmatprep.subr.mxu0 0.0
    %246 = vmatpush1.msra.mxu0 0.0
    %247 = vmatprep.subr.mxu0 0.0
    %248 = vmatpush1.msra.mxu0 0.0
    %249 = vmatprep.subr.mxu0 0.0
    %250 = vmatpush1.msra.mxu0 0.0
    %251 = vmatprep.subr.mxu0 0.0
    %252 = vmatpush1.msra.mxu0 0.0
    %253 = vmatprep.subr.mxu0 0.0
    %254 = vmatpush1.msra.mxu0 0.0
    %255 = vmatprep.subr.mxu0 0.0
    %256 = vmatpush1.msra.mxu0 0.0
    %257 = vmatprep.subr.mxu0 0.0
    %258 = vmatpush1.msra.mxu0 0.0
    %259 = vmatprep.subr.mxu0 0.0
    %260 = vmatpush1.msra.mxu0 0.0
    %261 = vmatprep.mubr.f32.mxu0 0.0
    %262 = vmatmul.mubr.f32.gmra.mrb[0].mxu0 %v77
    %v263 = vpop.f32.mrb[0].mxu0
    %v264 = vadd.f32 %v190, %v263
    %v265 = vpop.f32.mrb[0].mxu0
    %v266 = vadd.f32 %v194, %v265
    %267 = vmatprep.mubr.f32.mxu0 0.0
    %268 = vmatmul.mubr.f32.gmra.mrb[0].mxu0 %v80
    %v269 = vpop.f32.mrb[0].mxu0
    %v270 = vadd.f32 %v190, %v269
    %v271 = vpop.f32.mrb[0].mxu0
    %v272 = vadd.f32 %v194, %v271
    %273 = vdwg.mxu0
    %v274 = vmul.f32 %v264, 0.5
    %v275 = vmul.f32 %v266, 0.5
    %v276 = vmul.f32 %v270, 0.5
    %v277 = vmul.f32 %v272, 0.5
    %v278 = vmul.f32 %v264, %v264
    %v279 = vmul.f32 %v266, %v266
    %v280 = vmul.f32 %v270, %v270
    %v281 = vmul.f32 %v272, %v272
    %v282 = vmul.f32 %v278, %v264
    %v283 = vmul.f32 %v279, %v266
    %v284 = vmul.f32 %v280, %v270
    %v285 = vmul.f32 %v281, %v272
    %v286 = vmul.f32 %v282, 0.044715
    %v287 = vmul.f32 %v283, 0.044715
    %v288 = vmul.f32 %v284, 0.044715
    %v289 = vmul.f32 %v285, 0.044715
    %v290 = vadd.f32 %v264, %v286
    %v291 = vadd.f32 %v266, %v287
    %v292 = vadd.f32 %v270, %v288
    %v293 = vadd.f32 %v272, %v289
    %v294 = vmul.f32 %v290, 0.7978846
    %v295 = vmul.f32 %v291, 0.7978846
    %v296 = vmul.f32 %v292, 0.7978846
    %v297 = vmul.f32 %v293, 0.7978846
    %v298 = vtanh.pop %v294
    %v299 = vtanh.pop %v295
    %v300 = vtanh.pop %v296
    %v301 = vtanh.pop %v297
    %v302 = vadd.f32 %v298, 1.0
    %v303 = vadd.f32 %v299, 1.0
    %v304 = vadd.f32 %v300, 1.0
    %v305 = vadd.f32 %v301, 1.0
    %v306 = vmul.f32 %v274, %v302
    %v307 = vmul.f32 %v275, %v303
    %v308 = vmul.f32 %v276, %v304
    %v309 = vmul.f32 %v277, %v305
    %310 = vst [vmem:[#allocation8 + $0x8] sm:$0xff] %v306
    %311 = vst [vmem:[#allocation8 + $0x10] sm:$0xff] %v307
    %312 = vst [vmem:[#allocation8 + $0x20] sm:$0xff] %v308
    %313 = vst [vmem:[#allocation8 + $0x28] sm:$0xff] %v309
    // Predicated region
    $region34: #{tpu_custom_call.1} parent=1 // pred_check
      _
    $region35: #{tpu_custom_call.1} parent=1 // pred_check_branch
      %315 = sbr.rel (0) target = $region37
    $region36: #{tpu_custom_call.1} parent=1 // pred_region
      %s317 = ssub.s32 768, 768
      %318 = vsyncadd [#allocation4], %s317
      %s319 = sshll.u32 [#allocation8], 4
      %s320 = int_to_ptr.vmem [resolvable:$true] %s319
      %325 = dma.vmem_to_hbm [thread:$0]  %s320, 768, %s5, [#allocation4], 384, 384, 24
    $region37: #{tpu_custom_call.1} parent=1 // pred_fallthru
      _
    // Predicated region
    $region38: #{tpu_custom_call.1} parent=1 // pred_check
      _
    $region39: #{tpu_custom_call.1} parent=1 // pred_check_branch
      %327 = sbr.rel (0) target = $region41
    $region40: #{tpu_custom_call.1} parent=1 // pred_region
      %328 = dma.done [#allocation4], 768
    $region41: #{tpu_custom_call.1} parent=1 // pred_fallthru
      _
    %329 = vsyncpa [#allocation3], 1
    %330 = vsyncpa [#allocation6], 1
    %331 = vsyncpa [#allocation4], 1

</llo_original>
